<compile_context>
chip_gen: v7x
topology: tpu7x:2x2x1
jax: 0.10.0
libtpu: 0.0.40
codegen_flags: <defaults>
</compile_context>

<pallas_src>
import jax
import jax.numpy as jnp
from jax.experimental import pallas as pl
from jax.experimental.pallas import tpu as pltpu

NUM_CELLS = 20
IN_F = NUM_CELLS                 # 20
H1 = 128
H2 = 128
OUT = NUM_CELLS * NUM_CELLS      # 400


def _policy_kernel(x_ref, w1_ref, b1_ref, w2_ref, b2_ref, w3_ref, b3_ref, o_ref):
    # fc1 + relu (bf16 matmul inputs, f32 MXU accumulation)
    x = x_ref[...].astype(jnp.bfloat16)
    h = jnp.dot(x, w1_ref[...], preferred_element_type=jnp.float32)
    h = jnp.maximum(h + b1_ref[...], 0.0)
    # fc2 + relu
    h = jnp.dot(h.astype(jnp.bfloat16), w2_ref[...], preferred_element_type=jnp.float32)
    h = jnp.maximum(h + b2_ref[...], 0.0)
    # fc3 (no activation)
    o = jnp.dot(h.astype(jnp.bfloat16), w3_ref[...], preferred_element_type=jnp.float32)
    o_ref[...] = (o + b3_ref[...]).astype(o_ref.dtype)


def _round_up(n, m):
    return ((n + m - 1) // m) * m


def _choose_tb(B, block_b=1024):
    """Rows per grid step: multiple of 8, >= 64 (unless B is tiny), <= block_b,
    and aiming for >= 2 grid steps so v7x's two TensorCores both get work."""
    B = max(int(B), 1)
    if B <= 64:
        return _round_up(B, 8)
    tb = min(_round_up((B + 1) // 2, 8), block_b)
    return max(tb, 64)


def init_params(key):
    """f32 params in (in, out) layout, mimicking torch.nn.Linear default init."""
    ks = jax.random.split(key, 6)

    def linear(kw, kb, fan_in, fan_out):
        bound = 1.0 / jnp.sqrt(jnp.float32(fan_in))
        w = jax.random.uniform(kw, (fan_in, fan_out), jnp.float32, -bound, bound)
        b = jax.random.uniform(kb, (1, fan_out), jnp.float32, -bound, bound)
        return w, b

    w1, b1 = linear(ks[0], ks[1], IN_F, H1)
    w2, b2 = linear(ks[2], ks[3], H1, H2)
    w3, b3 = linear(ks[4], ks[5], H2, OUT)
    return (w1, b1, w2, b2, w3, b3)


def prepare_params(params):
    """Cast weights to bf16 once (no padding needed); biases stay f32 and 2-D (1, N)."""
    w1, b1, w2, b2, w3, b3 = params
    return (w1.astype(jnp.bfloat16), b1,
            w2.astype(jnp.bfloat16), b2,
            w3.astype(jnp.bfloat16), b3)


def policy_forward(x, prepared_params, *, block_b=1024):
    """x: (B, 20) float32 -> (B, 400) float32 logits."""
    w1, b1, w2, b2, w3, b3 = prepared_params
    B = x.shape[0]
    TB = _choose_tb(B, block_b)
    grid = (pl.cdiv(B, TB),)

    # Weights/biases: same block index every step -> stay resident in VMEM across steps.
    # (Default double-buffering of these small resident blocks costs ~170 KB extra VMEM;
    #  left as-is — negligible vs. the output tiles.)
    resident = lambda a: pl.BlockSpec(a.shape, lambda i: (0,) * a.ndim)

    return pl.pallas_call(
        _policy_kernel,
        out_shape=jax.ShapeDtypeStruct((B, OUT), jnp.float32),
        grid=grid,
        in_specs=[
            pl.BlockSpec((TB, IN_F), lambda i: (i, 0)),   # x: tiled over batch, full 20 lanes
            resident(w1), resident(b1),
            resident(w2), resident(b2),
            resident(w3), resident(b3),
        ],
        out_specs=pl.BlockSpec((TB, OUT), lambda i: (i, 0)),  # direct 400-wide stores
        compiler_params=pltpu.CompilerParams(
            dimension_semantics=("parallel",),  # lets v7x shard batch steps across its 2 TCs
        ),
    )(x, w1, b1, w2, b2, w3, b3)


def policy_forward_ref(x, params):
    w1, b1, w2, b2, w3, b3 = params
    h = jnp.maximum(x @ w1 + b1, 0.0)
    h = jnp.maximum(h @ w2 + b2, 0.0)
    return h @ w3 + b3


if __name__ == "__main__":
    key = jax.random.PRNGKey(0)
    k_param, k_x1, k_x2 = jax.random.split(key, 3)
    params = init_params(k_param)
    prepared = prepare_params(params)

    # Small shape consistent with the module: a handful of 20-dim states (single grid step).
    B = 8
    x = jax.random.normal(k_x1, (B, NUM_CELLS), jnp.float32)
    out = jax.block_until_ready(policy_forward(x, prepared))
    ref = policy_forward_ref(x, params)
    assert out.shape == (B, OUT)
    assert jnp.allclose(out, ref, atol=3e-2, rtol=3e-2), float(jnp.max(jnp.abs(out - ref)))

    # Exercise the multi-step grid + masked boundary-block path (B not a multiple of TB).
    B2 = 300
    x2 = jax.random.normal(k_x2, (B2, NUM_CELLS), jnp.float32)
    out2 = jax.block_until_ready(policy_forward(x2, prepared))
    ref2 = policy_forward_ref(x2, params)
    assert out2.shape == (B2, OUT)
    assert jnp.allclose(out2, ref2, atol=3e-2, rtol=3e-2), float(jnp.max(jnp.abs(out2 - ref2)))

    print("KERNEL_OK")
</pallas_src>

<mosaic_0001>
module attributes {stable_mosaic.version = 11 : i64} {
  func.func @_policy_kernel(%arg0: i32, %arg1: memref<8x20xf32, #tpu.memory_space<vmem>>, %arg2: memref<20x128xbf16, #tpu.memory_space<vmem>>, %arg3: memref<1x128xf32, #tpu.memory_space<vmem>>, %arg4: memref<128x128xbf16, #tpu.memory_space<vmem>>, %arg5: memref<1x128xf32, #tpu.memory_space<vmem>>, %arg6: memref<128x400xbf16, #tpu.memory_space<vmem>>, %arg7: memref<1x400xf32, #tpu.memory_space<vmem>>, %arg8: memref<8x400xf32, #tpu.memory_space<vmem>>) attributes {dimension_semantics = [#tpu.dimension_semantics<parallel>], iteration_bounds = array<i64: 1>, scalar_prefetch = 0 : i64, scratch_operands = 0 : i64, tpu.core_type = #tpu.core_type<tc>, window_params = [{transform_indices = @transform_0, window_bounds = array<i64: 8, 20>}, {pipeline_mode = #tpu.pipeline_mode<synchronous>, transform_indices = @transform_1, window_bounds = array<i64: 20, 128>}, {pipeline_mode = #tpu.pipeline_mode<synchronous>, transform_indices = @transform_2, window_bounds = array<i64: 1, 128>}, {pipeline_mode = #tpu.pipeline_mode<synchronous>, transform_indices = @transform_3, window_bounds = array<i64: 128, 128>}, {pipeline_mode = #tpu.pipeline_mode<synchronous>, transform_indices = @transform_4, window_bounds = array<i64: 1, 128>}, {pipeline_mode = #tpu.pipeline_mode<synchronous>, transform_indices = @transform_5, window_bounds = array<i64: 128, 400>}, {pipeline_mode = #tpu.pipeline_mode<synchronous>, transform_indices = @transform_6, window_bounds = array<i64: 1, 400>}, {transform_indices = @transform_7, window_bounds = array<i64: 8, 400>}]} {
    %c0 = arith.constant 0 : index
    %c0_0 = arith.constant 0 : index
    %0 = vector.load %arg1[%c0, %c0_0] : memref<8x20xf32, #tpu.memory_space<vmem>>, vector<8x20xf32>
    %1 = arith.truncf %0 : vector<8x20xf32> to vector<8x20xbf16>
    %c0_1 = arith.constant 0 : index
    %c0_2 = arith.constant 0 : index
    %2 = vector.load %arg2[%c0_1, %c0_2] : memref<20x128xbf16, #tpu.memory_space<vmem>>, vector<20x128xbf16>
    %cst = arith.constant dense<0.000000e+00> : vector<8x128xf32>
    %3 = tpu.matmul %1, %2, %cst {dimension_numbers = #tpu.dot_dimension_numbers<[1], [0], [0], [1], [0, 0, 1, 1], [], []>} : vector<8x20xbf16>, vector<20x128xbf16>, vector<8x128xf32> -> vector<8x128xf32>
    %c0_3 = arith.constant 0 : index
    %c0_4 = arith.constant 0 : index
    %4 = vector.load %arg3[%c0_3, %c0_4] : memref<1x128xf32, #tpu.memory_space<vmem>>, vector<1x128xf32>
    %5 = vector.broadcast %4 : vector<1x128xf32> to vector<8x128xf32>
    %6 = arith.addf %3, %5 : vector<8x128xf32>
    %cst_5 = arith.constant 0.000000e+00 : f32
    %7 = vector.broadcast %cst_5 : f32 to vector<8x128xf32>
    %8 = arith.maximumf %6, %7 : vector<8x128xf32>
    %9 = arith.truncf %8 : vector<8x128xf32> to vector<8x128xbf16>
    %c0_6 = arith.constant 0 : index
    %c0_7 = arith.constant 0 : index
    %10 = vector.load %arg4[%c0_6, %c0_7] : memref<128x128xbf16, #tpu.memory_space<vmem>>, vector<128x128xbf16>
    %cst_8 = arith.constant dense<0.000000e+00> : vector<8x128xf32>
    %11 = tpu.matmul %9, %10, %cst_8 {dimension_numbers = #tpu.dot_dimension_numbers<[1], [0], [0], [1], [0, 0, 1, 1], [], []>} : vector<8x128xbf16>, vector<128x128xbf16>, vector<8x128xf32> -> vector<8x128xf32>
    %c0_9 = arith.constant 0 : index
    %c0_10 = arith.constant 0 : index
    %12 = vector.load %arg5[%c0_9, %c0_10] : memref<1x128xf32, #tpu.memory_space<vmem>>, vector<1x128xf32>
    %13 = vector.broadcast %12 : vector<1x128xf32> to vector<8x128xf32>
    %14 = arith.addf %11, %13 : vector<8x128xf32>
    %cst_11 = arith.constant 0.000000e+00 : f32
    %15 = vector.broadcast %cst_11 : f32 to vector<8x128xf32>
    %16 = arith.maximumf %14, %15 : vector<8x128xf32>
    %17 = arith.truncf %16 : vector<8x128xf32> to vector<8x128xbf16>
    %c0_12 = arith.constant 0 : index
    %c0_13 = arith.constant 0 : index
    %18 = vector.load %arg6[%c0_12, %c0_13] : memref<128x400xbf16, #tpu.memory_space<vmem>>, vector<128x400xbf16>
    %cst_14 = arith.constant dense<0.000000e+00> : vector<8x400xf32>
    %19 = tpu.matmul %17, %18, %cst_14 {dimension_numbers = #tpu.dot_dimension_numbers<[1], [0], [0], [1], [0, 0, 1, 1], [], []>} : vector<8x128xbf16>, vector<128x400xbf16>, vector<8x400xf32> -> vector<8x400xf32>
    %c0_15 = arith.constant 0 : index
    %c0_16 = arith.constant 0 : index
    %20 = vector.load %arg7[%c0_15, %c0_16] : memref<1x400xf32, #tpu.memory_space<vmem>>, vector<1x400xf32>
    %21 = vector.broadcast %20 : vector<1x400xf32> to vector<8x400xf32>
    %22 = arith.addf %19, %21 : vector<8x400xf32>
    %c0_17 = arith.constant 0 : index
    %c0_18 = arith.constant 0 : index
    %23 = vector.load %arg8[%c0_17, %c0_18] : memref<8x400xf32, #tpu.memory_space<vmem>>, vector<8x400xf32>
    tpu.vector_store %arg8[%c0_17, %c0_18], %22 {strides = array<i32>} : memref<8x400xf32, #tpu.memory_space<vmem>>, vector<8x400xf32>,
    return
  }
  func.func @transform_0(%arg0: i32) -> (i32, i32) {
    %c0_i32 = arith.constant 0 : i32
    %c0_i32_0 = arith.constant 0 : i32
    return %arg0, %c0_i32 : i32, i32
  }
  func.func @transform_1(%arg0: i32) -> (i32, i32) {
    %c0_i32 = arith.constant 0 : i32
    %c0_i32_0 = arith.constant 0 : i32
    %c0_i32_1 = arith.constant 0 : i32
    return %c0_i32, %c0_i32_0 : i32, i32
  }
  func.func @transform_2(%arg0: i32) -> (i32, i32) {
    %c0_i32 = arith.constant 0 : i32
    %c0_i32_0 = arith.constant 0 : i32
    %c0_i32_1 = arith.constant 0 : i32
    return %c0_i32, %c0_i32_0 : i32, i32
  }
  func.func @transform_3(%arg0: i32) -> (i32, i32) {
    %c0_i32 = arith.constant 0 : i32
    %c0_i32_0 = arith.constant 0 : i32
    %c0_i32_1 = arith.constant 0 : i32
    return %c0_i32, %c0_i32_0 : i32, i32
  }
  func.func @transform_4(%arg0: i32) -> (i32, i32) {
    %c0_i32 = arith.constant 0 : i32
    %c0_i32_0 = arith.constant 0 : i32
    %c0_i32_1 = arith.constant 0 : i32
    return %c0_i32, %c0_i32_0 : i32, i32
  }
  func.func @transform_5(%arg0: i32) -> (i32, i32) {
    %c0_i32 = arith.constant 0 : i32
    %c0_i32_0 = arith.constant 0 : i32
    %c0_i32_1 = arith.constant 0 : i32
    return %c0_i32, %c0_i32_0 : i32, i32
  }
  func.func @transform_6(%arg0: i32) -> (i32, i32) {
    %c0_i32 = arith.constant 0 : i32
    %c0_i32_0 = arith.constant 0 : i32
    %c0_i32_1 = arith.constant 0 : i32
    return %c0_i32, %c0_i32_0 : i32, i32
  }
  func.func @transform_7(%arg0: i32) -> (i32, i32) {
    %c0_i32 = arith.constant 0 : i32
    %c0_i32_0 = arith.constant 0 : i32
    return %arg0, %c0_i32 : i32, i32
  }
}

</mosaic_0001>

<llo_original>
// kernel: tpu_custom_call.1
$region0: #{tpu_custom_call.1}
  #allocation0 [shape = 'u32[]', space=smem, size = 0x4, offset = 0x4, fixed_abs, tag = 'smem constant byte address 0x4 - core index']
  #allocation1 [shape = 'u32[144,128]{1,0:T(1,128)}', space=vmem, size = 0x12000, scoped, tag = 'internal scratch']
  %s0 = inlined_call_operand.vmem [shape: f32[8,20], index: 0, kind: input, shape index: {}]
  %s1 = inlined_call_operand.vmem [shape: bf16[20,128], index: 1, kind: input, shape index: {}]
  %s2 = inlined_call_operand.vmem [shape: f32[1,128], index: 2, kind: input, shape index: {}]
  %s3 = inlined_call_operand.vmem [shape: bf16[128,128], index: 3, kind: input, shape index: {}]
  %s4 = inlined_call_operand.vmem [shape: f32[1,128], index: 4, kind: input, shape index: {}]
  %s5 = inlined_call_operand.vmem [shape: bf16[128,400], index: 5, kind: input, shape index: {}]
  %s6 = inlined_call_operand.vmem [shape: f32[1,400], index: 6, kind: input, shape index: {}]
  %s7 = inlined_call_operand.hbm [shape: f32[8,400], index: 7, kind: output, shape index: {}]
  %s8 = sld [smem:[#allocation0]]
  $region38: #{tpu_custom_call.1} parent=0
    _
  %s10 = ssub.s32 1, %s8
  %s11 = scalar_select 0, %s10, %s8
  $region1: #{tpu_custom_call.1} parent=0
    #allocation2 [shape = 'u8[16384]{0}', space=vmem, size = 0x4000, scoped, tag = 'output window, operand 0, single buffered']
    #allocation3 [shape = 's32[1]{0}', space=sflag, size = 0x4, scoped, tag = 'scoped memory for tpu_custom_call.1']
    %12 = vsyncpa [#allocation3], 0
    // Predicated region
    $region2: #{tpu_custom_call.1} parent=1 // pred_check
      _
    $region3: #{tpu_custom_call.1} parent=1 // pred_check_branch
      %14 = sbr.rel (0) target = $region5
    $region4: #{tpu_custom_call.1} parent=1 // pred_region
      _
    $region5: #{tpu_custom_call.1} parent=1 // pred_fallthru
      _
    // Predicated region
    $region6: #{tpu_custom_call.1} parent=1 // pred_check
      _
    $region7: #{tpu_custom_call.1} parent=1 // pred_check_branch
      %16 = sbr.rel (0) target = $region9
    $region8: #{tpu_custom_call.1} parent=1 // pred_region
      _
    $region9: #{tpu_custom_call.1} parent=1 // pred_fallthru
      _
    // Predicated region
    $region10: #{tpu_custom_call.1} parent=1 // pred_check
      _
    $region11: #{tpu_custom_call.1} parent=1 // pred_check_branch
      %18 = sbr.rel (0) target = $region13
    $region12: #{tpu_custom_call.1} parent=1 // pred_region
      _
    $region13: #{tpu_custom_call.1} parent=1 // pred_fallthru
      _
    // Predicated region
    $region14: #{tpu_custom_call.1} parent=1 // pred_check
      _
    $region15: #{tpu_custom_call.1} parent=1 // pred_check_branch
      %20 = sbr.rel (0) target = $region17
    $region16: #{tpu_custom_call.1} parent=1 // pred_region
      _
    $region17: #{tpu_custom_call.1} parent=1 // pred_fallthru
      _
    // Predicated region
    $region18: #{tpu_custom_call.1} parent=1 // pred_check
      _
    $region19: #{tpu_custom_call.1} parent=1 // pred_check_branch
      %22 = sbr.rel (0) target = $region21
    $region20: #{tpu_custom_call.1} parent=1 // pred_region
      _
    $region21: #{tpu_custom_call.1} parent=1 // pred_fallthru
      _
    // Predicated region
    $region22: #{tpu_custom_call.1} parent=1 // pred_check
      _
    $region23: #{tpu_custom_call.1} parent=1 // pred_check_branch
      %24 = sbr.rel (0) target = $region25
    $region24: #{tpu_custom_call.1} parent=1 // pred_region
      _
    $region25: #{tpu_custom_call.1} parent=1 // pred_fallthru
      _
    // Predicated region
    $region26: #{tpu_custom_call.1} parent=1 // pred_check
      _
    $region27: #{tpu_custom_call.1} parent=1 // pred_check_branch
      %26 = sbr.rel (0) target = $region29
    $region28: #{tpu_custom_call.1} parent=1 // pred_region
      _
    $region29: #{tpu_custom_call.1} parent=1 // pred_fallthru
      _
    %v28 = vld [vmem:[%s0] sm:$0xff]
    %v29 = vpack.c.bf16 %v28, %v28
    %v30 = vld [vmem:[%s1] sm:$0xf]
    %v31 = vld [vmem:[%s1 + $0x4] sm:$0xf]
    %v32 = vld [vmem:[%s1 + $0x8] sm:$0x3]
    %v33 = vld [vmem:[%s2] sm:$0x1]
    %v35 = vlaneseq
    %v36 = vshrl.u32 %v35, 7
    %v37 = vsub.s32 0, %v36
    %v38 = vrot.slane %v33, %v37
    %v43 = vunpack.c.l.b16 %v30
    %v44 = vunpack.c.l.b16 %v31
    %v45 = vunpack.c.l.b16 %v32
    %v46 = vpack.c.b16 %v44, %v43
    %v47 = vpack.c.b16 %v45, %v45
    %vm49 = vcmask 162816
    %v51 = vsel %vm49, %v29, 0
    %vm53 = vcmask 1041408
    %v55 = vsel %vm53, %v47, 0
    %57 = vmatprep.subr.bf16.mxu0 0
    %58 = vmatpush1.bf16.msra.mxu0 %v46
    %59 = vmatprep.subr.bf16.mxu0 0
    %60 = vmatpush1.bf16.msra.mxu0 %v55
    %61 = vmatprep.subr.bf16.mxu0 0
    %62 = vmatpush1.bf16.msra.mxu0 0
    %63 = vmatprep.subr.bf16.mxu0 0
    %64 = vmatpush1.bf16.msra.mxu0 0
    %65 = vmatprep.subr.bf16.mxu0 0
    %66 = vmatpush1.bf16.msra.mxu0 0
    %67 = vmatprep.subr.bf16.mxu0 0
    %68 = vmatpush1.bf16.msra.mxu0 0
    %69 = vmatprep.subr.bf16.mxu0 0
    %70 = vmatpush1.bf16.msra.mxu0 0
    %71 = vmatprep.subr.bf16.mxu0 0
    %72 = vmatpush1.bf16.msra.mxu0 0
    %73 = vmatprep.subr.bf16.mxu0 0
    %74 = vmatpush1.bf16.msra.mxu0 0
    %75 = vmatprep.subr.bf16.mxu0 0
    %76 = vmatpush1.bf16.msra.mxu0 0
    %77 = vmatprep.subr.bf16.mxu0 0
    %78 = vmatpush1.bf16.msra.mxu0 0
    %79 = vmatprep.subr.bf16.mxu0 0
    %80 = vmatpush1.bf16.msra.mxu0 0
    %81 = vmatprep.subr.bf16.mxu0 0
    %82 = vmatpush1.bf16.msra.mxu0 0
    %83 = vmatprep.subr.bf16.mxu0 0
    %84 = vmatpush1.bf16.msra.mxu0 0
    %85 = vmatprep.subr.bf16.mxu0 0
    %86 = vmatpush1.bf16.msra.mxu0 0
    %87 = vmatprep.subr.bf16.mxu0 0
    %88 = vmatpush1.bf16.msra.mxu0 0
    %89 = vmatprep.mubr.bf16.mxu0 0
    %90 = vmatmul.mubr.bf16.gmra.mrb[0].mxu0 %v51
    %v91 = vpop.f32.mrb[0].mxu0
    %v92 = vadd.f32 %v38, %v91
    %v93 = vpop.f32.mrb[0].mxu0
    %v94 = vpop.f32.mrb[0].mxu0
    %v95 = vpop.f32.mrb[0].mxu0
    %96 = vdwg.mxu0
    %v97 = vmax.f32 %v92, 0.0
    %v98 = vpack.c.bf16 %v97, %v97
    %v99 = vld [vmem:[%s3] sm:$0xf]
    %v100 = vld [vmem:[%s3 + $0x4] sm:$0xf]
    %v101 = vld [vmem:[%s3 + $0x8] sm:$0xf]
    %v102 = vld [vmem:[%s3 + $0xc] sm:$0xf]
    %v103 = vld [vmem:[%s3 + $0x10] sm:$0xf]
    %v104 = vld [vmem:[%s3 + $0x14] sm:$0xf]
    %v105 = vld [vmem:[%s3 + $0x18] sm:$0xf]
    %v106 = vld [vmem:[%s3 + $0x1c] sm:$0xf]
    %v107 = vld [vmem:[%s3 + $0x20] sm:$0xf]
    %v108 = vld [vmem:[%s3 + $0x24] sm:$0xf]
    %v109 = vld [vmem:[%s3 + $0x28] sm:$0xf]
    %v110 = vld [vmem:[%s3 + $0x2c] sm:$0xf]
    %v111 = vld [vmem:[%s3 + $0x30] sm:$0xf]
    %v112 = vld [vmem:[%s3 + $0x34] sm:$0xf]
    %v113 = vld [vmem:[%s3 + $0x38] sm:$0xf]
    %v114 = vld [vmem:[%s3 + $0x3c] sm:$0xf]
    %v115 = vld [vmem:[%s4] sm:$0x1]
    %v117 = vlaneseq
    %v118 = vshrl.u32 %v117, 7
    %v119 = vsub.s32 0, %v118
    %v120 = vrot.slane %v115, %v119
    %v138 = vunpack.c.l.b16 %v99
    %v139 = vunpack.c.l.b16 %v100
    %v140 = vunpack.c.l.b16 %v101
    %v141 = vunpack.c.l.b16 %v102
    %v142 = vunpack.c.l.b16 %v103
    %v143 = vunpack.c.l.b16 %v104
    %v144 = vunpack.c.l.b16 %v105
    %v145 = vunpack.c.l.b16 %v106
    %v146 = vunpack.c.l.b16 %v107
    %v147 = vunpack.c.l.b16 %v108
    %v148 = vunpack.c.l.b16 %v109
    %v149 = vunpack.c.l.b16 %v110
    %v150 = vunpack.c.l.b16 %v111
    %v151 = vunpack.c.l.b16 %v112
    %v152 = vunpack.c.l.b16 %v113
    %v153 = vunpack.c.l.b16 %v114
    %v154 = vpack.c.b16 %v139, %v138
    %v155 = vpack.c.b16 %v141, %v140
    %v156 = vpack.c.b16 %v143, %v142
    %v157 = vpack.c.b16 %v145, %v144
    %v158 = vpack.c.b16 %v147, %v146
    %v159 = vpack.c.b16 %v149, %v148
    %v160 = vpack.c.b16 %v151, %v150
    %v161 = vpack.c.b16 %v153, %v152
    %170 = vmatprep.subr.bf16.mxu0 0
    %171 = vmatpush1.bf16.msra.mxu0 %v154
    %172 = vmatprep.subr.bf16.mxu0 0
    %173 = vmatpush1.bf16.msra.mxu0 %v155
    %174 = vmatprep.subr.bf16.mxu0 0
    %175 = vmatpush1.bf16.msra.mxu0 %v156
    %176 = vmatprep.subr.bf16.mxu0 0
    %177 = vmatpush1.bf16.msra.mxu0 %v157
    %178 = vmatprep.subr.bf16.mxu0 0
    %179 = vmatpush1.bf16.msra.mxu0 %v158
    %180 = vmatprep.subr.bf16.mxu0 0
    %181 = vmatpush1.bf16.msra.mxu0 %v159
    %182 = vmatprep.subr.bf16.mxu0 0
    %183 = vmatpush1.bf16.msra.mxu0 %v160
    %184 = vmatprep.subr.bf16.mxu0 0
    %185 = vmatpush1.bf16.msra.mxu0 %v161
    %186 = vmatprep.subr.bf16.mxu0 0
    %187 = vmatpush1.bf16.msra.mxu0 0
    %188 = vmatprep.subr.bf16.mxu0 0
    %189 = vmatpush1.bf16.msra.mxu0 0
    %190 = vmatprep.subr.bf16.mxu0 0
    %191 = vmatpush1.bf16.msra.mxu0 0
    %192 = vmatprep.subr.bf16.mxu0 0
    %193 = vmatpush1.bf16.msra.mxu0 0
    %194 = vmatprep.subr.bf16.mxu0 0
    %195 = vmatpush1.bf16.msra.mxu0 0
    %196 = vmatprep.subr.bf16.mxu0 0
    %197 = vmatpush1.bf16.msra.mxu0 0
    %198 = vmatprep.subr.bf16.mxu0 0
    %199 = vmatpush1.bf16.msra.mxu0 0
    %200 = vmatprep.subr.bf16.mxu0 0
    %201 = vmatpush1.bf16.msra.mxu0 0
    %202 = vmatprep.mubr.bf16.mxu0 0
    %203 = vmatmul.mubr.bf16.gmra.mrb[0].mxu0 %v98
    %v204 = vpop.f32.mrb[0].mxu0
    %v205 = vadd.f32 %v120, %v204
    %v206 = vpop.f32.mrb[0].mxu0
    %v207 = vpop.f32.mrb[0].mxu0
    %v208 = vpop.f32.mrb[0].mxu0
    %209 = vdwg.mxu0
    %v210 = vmax.f32 %v205, 0.0
    %v211 = vpack.c.bf16 %v210, %v210
    %v212 = vld [vmem:[%s5] sm:$0xff]
    %v213 = vld [vmem:[%s5 + $0x8] sm:$0xff]
    %v214 = vld [vmem:[%s5 + $0x10] sm:$0xff]
    %v215 = vld [vmem:[%s5 + $0x18] sm:$0xff]
    %v216 = vld [vmem:[%s5 + $0x20] sm:$0xff]
    %v217 = vld [vmem:[%s5 + $0x28] sm:$0xff]
    %v218 = vld [vmem:[%s5 + $0x30] sm:$0xff]
    %v219 = vld [vmem:[%s5 + $0x38] sm:$0xff]
    %v220 = vld [vmem:[%s5 + $0x40] sm:$0xff]
    %v221 = vld [vmem:[%s5 + $0x48] sm:$0xff]
    %v222 = vld [vmem:[%s5 + $0x50] sm:$0xff]
    %v223 = vld [vmem:[%s5 + $0x58] sm:$0xff]
    %v224 = vld [vmem:[%s5 + $0x60] sm:$0xff]
    %v225 = vld [vmem:[%s5 + $0x68] sm:$0xff]
    %v226 = vld [vmem:[%s5 + $0x70] sm:$0xff]
    %v227 = vld [vmem:[%s5 + $0x78] sm:$0xff]
    %v228 = vld [vmem:[%s5 + $0x80] sm:$0xff]
    %v229 = vld [vmem:[%s5 + $0x88] sm:$0xff]
    %v230 = vld [vmem:[%s5 + $0x90] sm:$0xff]
    %v231 = vld [vmem:[%s5 + $0x98] sm:$0xff]
    %v232 = vld [vmem:[%s5 + $0xa0] sm:$0xff]
    %v233 = vld [vmem:[%s5 + $0xa8] sm:$0xff]
    %v234 = vld [vmem:[%s5 + $0xb0] sm:$0xff]
    %v235 = vld [vmem:[%s5 + $0xb8] sm:$0xff]
    %v236 = vld [vmem:[%s5 + $0xc0] sm:$0xff]
    %v237 = vld [vmem:[%s5 + $0xc8] sm:$0xff]
    %v238 = vld [vmem:[%s5 + $0xd0] sm:$0xff]
    %v239 = vld [vmem:[%s5 + $0xd8] sm:$0xff]
    %v240 = vld [vmem:[%s5 + $0xe0] sm:$0xff]
    %v241 = vld [vmem:[%s5 + $0xe8] sm:$0xff]
    %v242 = vld [vmem:[%s5 + $0xf0] sm:$0xff]
    %v243 = vld [vmem:[%s5 + $0xf8] sm:$0xff]
    %v244 = vld [vmem:[%s6] sm:$0xf]
    %v246 = vlaneseq
    %v247 = vshrl.u32 %v246, 7
    %v248 = vsub.s32 0, %v247
    %v249 = vrot.slane %v244, %v248
    %v250 = vlaneseq
    %v251 = vshrl.u32 %v250, 7
    %v252 = vsub.s32 1, %v251
    %v253 = vrot.slane %v244, %v252
    %v254 = vlaneseq
    %v255 = vshrl.u32 %v254, 7
    %v256 = vsub.s32 2, %v255
    %v257 = vrot.slane %v244, %v256
    %v258 = vlaneseq
    %v259 = vshrl.u32 %v258, 7
    %v260 = vsub.s32 3, %v259
    %v261 = vrot.slane %v244, %v260
    %v298 = vunpack.c.l.b16 %v212
    %v299 = vunpack.c.h.b16 %v212
    %v300 = vunpack.c.l.b16 %v213
    %v301 = vunpack.c.h.b16 %v213
    %v302 = vunpack.c.l.b16 %v214
    %v303 = vunpack.c.h.b16 %v214
    %v304 = vunpack.c.l.b16 %v215
    %v305 = vunpack.c.h.b16 %v215
    %v306 = vunpack.c.l.b16 %v216
    %v307 = vunpack.c.h.b16 %v216
    %v308 = vunpack.c.l.b16 %v217
    %v309 = vunpack.c.h.b16 %v217
    %v310 = vunpack.c.l.b16 %v218
    %v311 = vunpack.c.h.b16 %v218
    %v312 = vunpack.c.l.b16 %v219
    %v313 = vunpack.c.h.b16 %v219
    %v314 = vunpack.c.l.b16 %v220
    %v315 = vunpack.c.h.b16 %v220
    %v316 = vunpack.c.l.b16 %v221
    %v317 = vunpack.c.h.b16 %v221
    %v318 = vunpack.c.l.b16 %v222
    %v319 = vunpack.c.h.b16 %v222
    %v320 = vunpack.c.l.b16 %v223
    %v321 = vunpack.c.h.b16 %v223
    %v322 = vunpack.c.l.b16 %v224
    %v323 = vunpack.c.h.b16 %v224
    %v324 = vunpack.c.l.b16 %v225
    %v325 = vunpack.c.h.b16 %v225
    %v326 = vunpack.c.l.b16 %v226
    %v327 = vunpack.c.h.b16 %v226
    %v328 = vunpack.c.l.b16 %v227
    %v329 = vunpack.c.h.b16 %v227
    %v330 = vunpack.c.l.b16 %v228
    %v331 = vunpack.c.h.b16 %v228
    %v332 = vunpack.c.l.b16 %v229
    %v333 = vunpack.c.h.b16 %v229
    %v334 = vunpack.c.l.b16 %v230
    %v335 = vunpack.c.h.b16 %v230
    %v336 = vunpack.c.l.b16 %v231
    %v337 = vunpack.c.h.b16 %v231
    %v338 = vunpack.c.l.b16 %v232
    %v339 = vunpack.c.h.b16 %v232
    %v340 = vunpack.c.l.b16 %v233
    %v341 = vunpack.c.h.b16 %v233
    %v342 = vunpack.c.l.b16 %v234
    %v343 = vunpack.c.h.b16 %v234
    %v344 = vunpack.c.l.b16 %v235
    %v345 = vunpack.c.h.b16 %v235
    %v346 = vunpack.c.l.b16 %v236
    %v347 = vunpack.c.h.b16 %v236
    %v348 = vunpack.c.l.b16 %v237
    %v349 = vunpack.c.h.b16 %v237
    %v350 = vunpack.c.l.b16 %v238
    %v351 = vunpack.c.h.b16 %v238
    %v352 = vunpack.c.l.b16 %v239
    %v353 = vunpack.c.h.b16 %v239
    %v354 = vunpack.c.l.b16 %v240
    %v355 = vunpack.c.h.b16 %v240
    %v356 = vunpack.c.l.b16 %v241
    %v357 = vunpack.c.h.b16 %v241
    %v358 = vunpack.c.l.b16 %v242
    %v359 = vunpack.c.h.b16 %v242
    %v360 = vunpack.c.l.b16 %v243
    %v361 = vunpack.c.h.b16 %v243
    %v362 = vpack.c.b16 %v302, %v298
    %v363 = vpack.c.b16 %v303, %v299
    %v364 = vpack.c.b16 %v304, %v300
    %v365 = vpack.c.b16 %v305, %v301
    %v366 = vpack.c.b16 %v310, %v306
    %v367 = vpack.c.b16 %v311, %v307
    %v368 = vpack.c.b16 %v312, %v308
    %v369 = vpack.c.b16 %v313, %v309
    %v370 = vpack.c.b16 %v318, %v314
    %v371 = vpack.c.b16 %v319, %v315
    %v372 = vpack.c.b16 %v320, %v316
    %v373 = vpack.c.b16 %v321, %v317
    %v374 = vpack.c.b16 %v326, %v322
    %v375 = vpack.c.b16 %v327, %v323
    %v376 = vpack.c.b16 %v328, %v324
    %v377 = vpack.c.b16 %v329, %v325
    %v378 = vpack.c.b16 %v334, %v330
    %v379 = vpack.c.b16 %v335, %v331
    %v380 = vpack.c.b16 %v336, %v332
    %v381 = vpack.c.b16 %v337, %v333
    %v382 = vpack.c.b16 %v342, %v338
    %v383 = vpack.c.b16 %v343, %v339
    %v384 = vpack.c.b16 %v344, %v340
    %v385 = vpack.c.b16 %v345, %v341
    %v386 = vpack.c.b16 %v350, %v346
    %v387 = vpack.c.b16 %v351, %v347
    %v388 = vpack.c.b16 %v352, %v348
    %v389 = vpack.c.b16 %v353, %v349
    %v390 = vpack.c.b16 %v358, %v354
    %v391 = vpack.c.b16 %v359, %v355
    %v392 = vpack.c.b16 %v360, %v356
    %v393 = vpack.c.b16 %v361, %v357
    %426 = vmatprep.subr.bf16.mxu0 %v363
    %427 = vmatpush1.bf16.msra.mxu0 %v362
    %428 = vmatprep.subr.bf16.mxu0 %v367
    %429 = vmatpush1.bf16.msra.mxu0 %v366
    %430 = vmatprep.subr.bf16.mxu0 %v371
    %431 = vmatpush1.bf16.msra.mxu0 %v370
    %432 = vmatprep.subr.bf16.mxu0 %v375
    %433 = vmatpush1.bf16.msra.mxu0 %v374
    %434 = vmatprep.subr.bf16.mxu0 %v379
    %435 = vmatpush1.bf16.msra.mxu0 %v378
    %436 = vmatprep.subr.bf16.mxu0 %v383
    %437 = vmatpush1.bf16.msra.mxu0 %v382
    %438 = vmatprep.subr.bf16.mxu0 %v387
    %439 = vmatpush1.bf16.msra.mxu0 %v386
    %440 = vmatprep.subr.bf16.mxu0 %v391
    %441 = vmatpush1.bf16.msra.mxu0 %v390
    %442 = vmatprep.subr.bf16.mxu0 0
    %443 = vmatpush1.bf16.msra.mxu0 0
    %444 = vmatprep.subr.bf16.mxu0 0
    %445 = vmatpush1.bf16.msra.mxu0 0
    %446 = vmatprep.subr.bf16.mxu0 0
    %447 = vmatpush1.bf16.msra.mxu0 0
    %448 = vmatprep.subr.bf16.mxu0 0
    %449 = vmatpush1.bf16.msra.mxu0 0
    %450 = vmatprep.subr.bf16.mxu0 0
    %451 = vmatpush1.bf16.msra.mxu0 0
    %452 = vmatprep.subr.bf16.mxu0 0
    %453 = vmatpush1.bf16.msra.mxu0 0
    %454 = vmatprep.subr.bf16.mxu0 0
    %455 = vmatpush1.bf16.msra.mxu0 0
    %456 = vmatprep.subr.bf16.mxu0 0
    %457 = vmatpush1.bf16.msra.mxu0 0
    %458 = vmatprep.mubr.bf16.mxu0 0
    %459 = vmatmul.mubr.bf16.gmra.mrb[0].mxu0 %v211
    %v460 = vpop.f32.mrb[0].mxu0
    %v461 = vadd.f32 %v249, %v460
    %v462 = vpop.f32.mrb[0].mxu0
    %v463 = vadd.f32 %v253, %v462
    %v464 = vpop.f32.mrb[0].mxu0
    %v465 = vpop.f32.mrb[0].mxu0
    %466 = vdwg.mxu0
    %467 = vmatprep.subr.bf16.mxu0 %v365
    %468 = vmatpush1.bf16.msra.mxu0 %v364
    %469 = vmatprep.subr.bf16.mxu0 %v369
    %470 = vmatpush1.bf16.msra.mxu0 %v368
    %471 = vmatprep.subr.bf16.mxu0 %v373
    %472 = vmatpush1.bf16.msra.mxu0 %v372
    %473 = vmatprep.subr.bf16.mxu0 %v377
    %474 = vmatpush1.bf16.msra.mxu0 %v376
    %475 = vmatprep.subr.bf16.mxu0 %v381
    %476 = vmatpush1.bf16.msra.mxu0 %v380
    %477 = vmatprep.subr.bf16.mxu0 %v385
    %478 = vmatpush1.bf16.msra.mxu0 %v384
    %479 = vmatprep.subr.bf16.mxu0 %v389
    %480 = vmatpush1.bf16.msra.mxu0 %v388
    %481 = vmatprep.subr.bf16.mxu0 %v393
    %482 = vmatpush1.bf16.msra.mxu0 %v392
    %483 = vmatprep.subr.bf16.mxu0 0
    %484 = vmatpush1.bf16.msra.mxu0 0
    %485 = vmatprep.subr.bf16.mxu0 0
    %486 = vmatpush1.bf16.msra.mxu0 0
    %487 = vmatprep.subr.bf16.mxu0 0
    %488 = vmatpush1.bf16.msra.mxu0 0
    %489 = vmatprep.subr.bf16.mxu0 0
    %490 = vmatpush1.bf16.msra.mxu0 0
    %491 = vmatprep.subr.bf16.mxu0 0
    %492 = vmatpush1.bf16.msra.mxu0 0
    %493 = vmatprep.subr.bf16.mxu0 0
    %494 = vmatpush1.bf16.msra.mxu0 0
    %495 = vmatprep.subr.bf16.mxu0 0
    %496 = vmatpush1.bf16.msra.mxu0 0
    %497 = vmatprep.subr.bf16.mxu0 0
    %498 = vmatpush1.bf16.msra.mxu0 0
    %499 = vmatprep.mubr.bf16.mxu0 0
    %500 = vmatmul.mubr.bf16.gmra.mrb[0].mxu0 %v211
    %v501 = vpop.f32.mrb[0].mxu0
    %v502 = vadd.f32 %v257, %v501
    %v503 = vpop.f32.mrb[0].mxu0
    %v504 = vadd.f32 %v261, %v503
    %v505 = vpop.f32.mrb[0].mxu0
    %v506 = vpop.f32.mrb[0].mxu0
    %507 = vdwg.mxu0
    %508 = vst [vmem:[#allocation2] sm:$0xff] %v461
    %509 = vst [vmem:[#allocation2 + $0x8] sm:$0xff] %v463
    %510 = vst [vmem:[#allocation2 + $0x10] sm:$0xff] %v502
    %vm511 = vcmask 130048
    %512 = vst.msk [vmem:[#allocation2 + $0x18] sm:$0xff] %vm511, %v504
    // Predicated region
    $region30: #{tpu_custom_call.1} parent=1 // pred_check
      _
    $region31: #{tpu_custom_call.1} parent=1 // pred_check_branch
      %514 = sbr.rel (0) target = $region33
    $region32: #{tpu_custom_call.1} parent=1 // pred_region
      %s516 = ssub.s32 512, 512
      %517 = vsyncadd [#allocation3], %s516
      %s519 = sshll.u32 [#allocation2], 4
      %s520 = int_to_ptr.vmem [resolvable:$true] %s519
      %522 = dma.vmem_to_hbm [thread:$0]  %s520, 512, %s7, [#allocation3]
    $region33: #{tpu_custom_call.1} parent=1 // pred_fallthru
      _
    // Predicated region
    $region34: #{tpu_custom_call.1} parent=1 // pred_check
      _
    $region35: #{tpu_custom_call.1} parent=1 // pred_check_branch
      %524 = sbr.rel (0) target = $region37
    $region36: #{tpu_custom_call.1} parent=1 // pred_region
      %525 = dma.done [#allocation3], 512
    $region37: #{tpu_custom_call.1} parent=1 // pred_fallthru
      _
    %526 = vsyncpa [#allocation3], 1

</llo_original>
